<compile_context>
chip_gen: v7x
topology: tpu7x:2x2x1
jax: 0.10.0
libtpu: 0.0.40
codegen_flags: <defaults>
</compile_context>

<pallas_src>
import functools
from collections import deque

import numpy as np
import jax
import jax.numpy as jnp
from jax.experimental import pallas as pl
from jax.experimental.pallas import tpu as pltpu


def _round_up(x, m):
    return ((x + m - 1) // m) * m


_VMEM_LIMIT_CACHE = None


def _vmem_limit_bytes():
    """64 MiB on 128-MiB-VMEM chips (v5e/v6e), 32 MiB otherwise (v7x / unknown)."""
    global _VMEM_LIMIT_CACHE
    if _VMEM_LIMIT_CACHE is None:
        limit = 32 * 1024 * 1024
        try:
            cap = pltpu.get_tpu_info().vmem_capacity_bytes
            if cap >= 128 * 1024 * 1024:
                limit = 64 * 1024 * 1024
        except Exception:
            pass
        _VMEM_LIMIT_CACHE = limit
    return _VMEM_LIMIT_CACHE


# ----------------------------------------------------------------------------
# Pallas kernel: per-pixel bank contrastive loss (one class per tile)
# ----------------------------------------------------------------------------
def _bank_contrast_kernel(tile_cls_ref, tile_cnt_ref, featT_ref, bank_ref,
                          out_ref, *, num_classes, c_pad, bank_len):
    t = pl.program_id(0)
    cnt = tile_cnt_ref[t]          # number of real pixels in this tile (SMEM)

    @pl.when(cnt > 0)
    def _():
        cls = tile_cls_ref[t]                                  # class id of this tile
        featT = featT_ref[...]                                 # (A_pad, T) bf16

        # One fused MXU push: rows [0:c_pad) are the per-class mean-bank vectors,
        # rows [c_pad:) are the own-class positive bank (all pre-scaled by 1/temp).
        sim = jnp.dot(bank_ref[...], featT,
                      preferred_element_type=jnp.float32)      # (c_pad+L_pad, T)
        mean_cls = sim[:c_pad, :]                              # (c_pad, T)
        sim_pos = sim[c_pad:, :]                               # (L_pad, T)

        # negatives: sum_j!=cls exp(<f, mean(bank_j)>/temp)
        row_c = jax.lax.broadcasted_iota(jnp.int32, mean_cls.shape, 0)
        neg_mask = jnp.logical_and(row_c != cls, row_c < num_classes)
        s_neg = jnp.sum(jnp.where(neg_mask, jnp.exp(mean_cls), 0.0),
                        axis=0, keepdims=True)                 # (1, T)
        log_s = jnp.log(s_neg)                                 # (1, T)

        # -log(exp(s)/(exp(s)+S)) == softplus(log S - s)   (overflow-safe, no div)
        x = log_s - sim_pos                                    # (L_pad, T)
        elem = jnp.maximum(x, 0.0) + jnp.log(1.0 + jnp.exp(-jnp.abs(x)))

        row_l = jax.lax.broadcasted_iota(jnp.int32, elem.shape, 0)
        valid = (row_l < bank_len).astype(jnp.float32)
        # Mean over the L own-class bank entries; lane-dense (1, T) store.
        out_ref[...] = jnp.sum(elem * valid, axis=0, keepdims=True) * (1.0 / bank_len)

    @pl.when(cnt == 0)
    def _():
        out_ref[...] = jnp.zeros_like(out_ref)


def _bank_contrast_pallas(tile_cls, tile_cnt, featT, bank_comb, *, num_classes,
                          c_pad, bank_len, tile_n):
    """featT: (A_pad, N_alloc) bf16, class-grouped & tile-padded pixels on lanes.
       bank_comb: (C, c_pad+L_pad, A_pad) bf16, pre-scaled by 1/temp.
       tile_cls / tile_cnt: (num_tiles,) int32, scalar-prefetched."""
    A_pad, N_alloc = featT.shape
    num_tiles = N_alloc // tile_n
    M_pad = bank_comb.shape[1]

    kernel = functools.partial(_bank_contrast_kernel, num_classes=num_classes,
                               c_pad=c_pad, bank_len=bank_len)

    grid_spec = pltpu.PrefetchScalarGridSpec(
        num_scalar_prefetch=2,
        grid=(num_tiles,),
        in_specs=[
            # feature tile for this grid step (pixels on the lane axis)
            pl.BlockSpec((A_pad, tile_n), lambda i, tc, tn: (0, i)),
            # fused [mean-bank ; own-class bank] block, selected by the
            # scalar-prefetched per-tile class id
            pl.BlockSpec((None, M_pad, A_pad), lambda i, tc, tn: (tc[i], 0, 0)),
        ],
        out_specs=pl.BlockSpec((1, tile_n), lambda i, tc, tn: (0, i)),
    )

    out = pl.pallas_call(
        kernel,
        out_shape=jax.ShapeDtypeStruct((1, N_alloc), jnp.float32),
        grid_spec=grid_spec,
        compiler_params=pltpu.CompilerParams(
            dimension_semantics=("parallel",),
            vmem_limit_bytes=_vmem_limit_bytes(),
        ),
    )(tile_cls, tile_cnt, featT, bank_comb)
    return out[0]                                              # (N_alloc,)


# ----------------------------------------------------------------------------
# Label down-scaling (one-hot avg-pool), matching torch downscale_label_ratio
# ----------------------------------------------------------------------------
def downscale_label_ratio_jax(gt, scale_factor, min_ratio, n_classes,
                              ignore_index=255):
    assert scale_factor >= 1
    if scale_factor == 1:
        return gt
    bs, orig_c, H, W = gt.shape
    assert orig_c == 1
    th, tw = H // scale_factor, W // scale_factor
    ign_sub = n_classes
    out = jnp.where(gt == ignore_index, ign_sub, gt)
    oh = jax.nn.one_hot(out[:, 0], n_classes + 1, dtype=jnp.float32)   # (B,H,W,C+1)
    oh = jnp.transpose(oh, (0, 3, 1, 2))                               # (B,C+1,H,W)
    pooled = oh.reshape(bs, n_classes + 1, th, scale_factor,
                        tw, scale_factor).mean(axis=(3, 5))
    gt_ratio = pooled.max(axis=1, keepdims=True)
    lab = jnp.argmax(pooled, axis=1)[:, None, :, :].astype(jnp.int32)
    lab = jnp.where(lab == ign_sub, ignore_index, lab)
    lab = jnp.where(gt_ratio < min_ratio, ignore_index, lab)
    return lab


# ----------------------------------------------------------------------------
# Static-shape forward core (jit-ed once per input shape)
# ----------------------------------------------------------------------------
@functools.partial(jax.jit, static_argnames=(
    "num_classes", "ignore_index", "use_avg_pool", "scale_min_ratio",
    "tile_n", "bank_len", "c_pad", "loss_weight"))
def _contrastive_forward_core(feat, mask, bank_comb, *, num_classes, ignore_index,
                              use_avg_pool, scale_min_ratio, tile_n, bank_len,
                              c_pad, loss_weight):
    B, A, Hf, Wf = feat.shape
    C = num_classes
    A_pad = bank_comb.shape[2]

    # 1) label down-scale to the feature resolution
    if use_avg_pool:
        scale = mask.shape[-1] // Wf
        mask_ds = downscale_label_ratio_jax(mask, scale, scale_min_ratio,
                                            C, ignore_index)
    else:
        Hm, Wm = mask.shape[-2:]
        ys = (jnp.arange(Hf) * (Hm / Hf)).astype(jnp.int32)
        xs = (jnp.arange(Wf) * (Wm / Wf)).astype(jnp.int32)
        mask_ds = mask[:, :, ys, :][:, :, :, xs]

    labels = mask_ds.reshape(-1).astype(jnp.int32)                     # (N,)
    N = labels.shape[0]
    feat_flat = jnp.transpose(feat, (0, 2, 3, 1)).reshape(N, A).astype(jnp.bfloat16)

    # 2) class-group valid pixels on device (static shapes)
    key = jnp.where(labels == ignore_index, C, labels)                 # invalid -> C
    order = jnp.argsort(key, stable=True).astype(jnp.int32)            # class-grouped
    key_sorted = key[order]

    counts = jnp.bincount(key, length=C + 1).astype(jnp.int32)         # (C+1,)
    counts_c = counts[:C]
    n_valid = jnp.sum(counts_c)

    starts_sorted = jnp.concatenate(
        [jnp.zeros((1,), jnp.int32), jnp.cumsum(counts)[:-1]])          # (C+1,)

    # per-class tile allocation inside a statically bounded buffer
    n_tiles_c = (counts_c + tile_n - 1) // tile_n                       # (C,)
    pstart = jnp.concatenate(
        [jnp.zeros((1,), jnp.int32), jnp.cumsum(n_tiles_c * tile_n)[:-1]])  # (C,)

    num_tiles = -(-N // tile_n) + C                                     # static bound
    N_alloc = num_tiles * tile_n

    ranks = jnp.arange(N, dtype=jnp.int32) - starts_sorted[key_sorted]
    dest = jnp.where(key_sorted < C,
                     pstart[jnp.clip(key_sorted, 0, C - 1)] + ranks,
                     N_alloc)                                           # invalid -> dump

    slot_src = jnp.full((N_alloc + 1,), -1, jnp.int32).at[dest].set(order)
    slot_src = slot_src[:N_alloc]
    slot_valid = slot_src >= 0

    # 3) gather / zero / pad / transpose features (bf16 throughout)
    feat_sel = jnp.take(feat_flat, jnp.maximum(slot_src, 0), axis=0)    # (N_alloc, A)
    feat_sel = feat_sel * slot_valid[:, None].astype(jnp.bfloat16)
    feat_sel = jnp.pad(feat_sel, ((0, 0), (0, A_pad - A)))
    featT = feat_sel.T                                                  # (A_pad, N_alloc)

    # 4) per-tile class id + valid-pixel count (scalar-prefetched)
    tile_ends = jnp.cumsum(n_tiles_c).astype(jnp.int32)                 # (C,)
    tile_starts = tile_ends - n_tiles_c
    t_idx = jnp.arange(num_tiles, dtype=jnp.int32)
    tile_cls = jnp.clip(jnp.searchsorted(tile_ends, t_idx, side='right'),
                        0, C - 1).astype(jnp.int32)
    tile_cnt = jnp.clip(counts_c[tile_cls]
                        - (t_idx - tile_starts[tile_cls]) * tile_n,
                        0, tile_n).astype(jnp.int32)

    # 5) kernel
    loss_pad = _bank_contrast_pallas(tile_cls, tile_cnt, featT, bank_comb,
                                     num_classes=C, c_pad=c_pad,
                                     bank_len=bank_len, tile_n=tile_n)  # (N_alloc,)

    # 6) back to torch order: class-grouped valid pixels == sorted order
    loss_sorted = jnp.take(loss_pad, jnp.clip(dest, 0, N_alloc - 1))    # (N,)
    return loss_weight * loss_sorted, n_valid


# ----------------------------------------------------------------------------
# Module wrapper
# ----------------------------------------------------------------------------
class ContrastiveLossPallas:
    """use_bank=True variant of mmseg ContrastiveLoss (forward pass only)."""

    def __init__(self, num_classes, use_avg_pool=True, scale_min_ratio=0.75,
                 contrast_temp=100.0, reduction='mean', loss_weight=1.0,
                 ignore_index=255, tile_n=2048):
        assert num_classes is not None and num_classes >= 2
        assert tile_n % 128 == 0
        self.num_classes = num_classes
        self.use_avg_pool = use_avg_pool
        self.scale_min_ratio = scale_min_ratio
        self.contrast_temp = contrast_temp
        self.reduction = reduction            # bank_contrastive ignores reduction
        self.loss_weight = loss_weight
        self.ignore_index = ignore_index
        self.tile_n = tile_n

    # ---- bank stacking: fused [per-class mean ; own-class block], 1/temp folded in
    def _stack_bank(self, bank, A, A_pad):
        C = self.num_classes
        inv_temp = 1.0 / self.contrast_temp
        means, blocks, lens = [], [], []
        for c in range(C):
            entries = [jnp.asarray(e, jnp.float32) for e in list(bank[c])[1:]]
            cls_bank = jnp.concatenate(entries, axis=0)                 # (L, A)
            lens.append(int(cls_bank.shape[0]))
            means.append(jnp.mean(cls_bank, axis=0))
            blocks.append(cls_bank)
        L = lens[0]
        # TODO(synk): unequal per-class bank lengths (bank still filling) would need
        # a per-class L scalar-prefetched into the kernel; equal lengths assumed.
        assert all(l == L for l in lens), "equal bank lengths assumed"
        L_pad = _round_up(L, 16)
        C_pad = _round_up(C, 16)
        bank_mean = jnp.stack(means, axis=0)                            # (C, A)
        bank_mean = jnp.pad(bank_mean, ((0, C_pad - C), (0, A_pad - A)))
        bank_pos = jnp.stack(blocks, axis=0)                            # (C, L, A)
        bank_pos = jnp.pad(bank_pos, ((0, 0), (0, L_pad - L), (0, A_pad - A)))
        bank_comb = jnp.concatenate(
            [jnp.broadcast_to(bank_mean[None], (C, C_pad, A_pad)), bank_pos],
            axis=1)                                                     # (C, C_pad+L_pad, A_pad)
        bank_comb = (bank_comb * inv_temp).astype(jnp.bfloat16)
        return bank_comb, L, C_pad

    def __call__(self, feat, mask, bank):
        B, A, Hf, Wf = feat.shape
        N = B * Hf * Wf
        A_pad = _round_up(A, 128)
        # clamp tile_n for small inputs (keeps >=2 tiles, avoids useless padding)
        tile_n = min(self.tile_n, _round_up(N, 128))

        bank_comb, L, C_pad = self._stack_bank(bank, A, A_pad)

        loss_sorted, n_valid = _contrastive_forward_core(
            feat, mask, bank_comb,
            num_classes=self.num_classes, ignore_index=self.ignore_index,
            use_avg_pool=self.use_avg_pool, scale_min_ratio=self.scale_min_ratio,
            tile_n=tile_n, bank_len=L, c_pad=C_pad,
            loss_weight=float(self.loss_weight))

        # TODO(synk): the torch module's output length equals the number of valid
        # pixels (data-dependent); this one int32 host read + slice is the only
        # dynamic-shape step.  A fully-jitted training path would keep the fixed
        # (N,) vector plus a validity weight instead.
        nv = int(n_valid)
        if nv == 0:
            return jnp.zeros((), jnp.float32)
        return loss_sorted[:nv]


# ----------------------------------------------------------------------------
# Pure numpy/f32 reference (mirrors the PyTorch code) for a sanity check
# ----------------------------------------------------------------------------
def _reference(feat, mask, bank, num_classes, contrast_temp, scale_min_ratio,
               ignore_index=255):
    scale = mask.shape[-1] // feat.shape[-1]
    m = downscale_label_ratio_jax(mask, scale, scale_min_ratio, num_classes,
                                  ignore_index)
    A = feat.shape[1]
    f = np.asarray(jnp.transpose(feat, (0, 2, 3, 1)).reshape(-1, A))
    mm = np.asarray(m).reshape(-1)
    keep = mm != ignore_index
    f, mm = f[keep], mm[keep]
    losses = []
    for cls in range(num_classes):
        cf = f[mm == cls]
        pos, neg = None, []
        for idx in range(num_classes):
            cb = np.concatenate([np.asarray(e) for e in list(bank[idx])[1:]], 0)
            sim = cf @ cb.T / contrast_temp
            if idx == cls:
                pos = sim
            else:
                neg.append(sim.mean(1, keepdims=True))
        neg = np.concatenate(neg, 1)
        ep = np.exp(pos)
        sn = np.exp(neg).sum(1, keepdims=True)
        losses.append((-np.log(ep / (ep + sn))).mean(1))
    return np.concatenate(losses, 0)


# ----------------------------------------------------------------------------
if __name__ == "__main__":
    key = jax.random.PRNGKey(0)
    B, A, Hf, Wf = 2, 32, 8, 8          # feat: NCHW
    C = 4                               # num_classes
    Hm, Wm = 16, 16                     # mask spatial (scale_factor = 2)

    k1, k2, k3 = jax.random.split(key, 3)
    feat = jax.random.normal(k1, (B, A, Hf, Wf), jnp.float32)

    # block-constant labels (so the 0.75 min-ratio check passes) + small ignore patch
    coarse = jax.random.randint(k2, (B, 1, Hf, Wf), 0, C, dtype=jnp.int32)
    mask = jnp.repeat(jnp.repeat(coarse, 2, axis=2), 2, axis=3)
    mask = mask.at[:, :, :2, :2].set(255)

    # memory bank: per class a deque of 3 feature chunks (the first one is skipped,
    # exactly like the torch code's `idx_bank[1:]`)
    bank_keys = jax.random.split(k3, C * 3)
    bank = [deque(jax.random.normal(bank_keys[c * 3 + j], (16, A), jnp.float32)
                  for j in range(3))
            for c in range(C)]

    criterion = ContrastiveLossPallas(num_classes=C, contrast_temp=100.0,
                                      scale_min_ratio=0.75, loss_weight=1.0,
                                      tile_n=2048)
    loss = criterion(feat, mask, bank)
    loss = jax.block_until_ready(loss)

    ref = _reference(feat, mask, bank, C, 100.0, 0.75)
    np.testing.assert_allclose(np.asarray(loss), ref, rtol=1e-2, atol=1e-2)

    print("KERNEL_OK")
</pallas_src>

<mosaic_0001>
module attributes {stable_mosaic.version = 11 : i64} {
  func.func private @main(%arg0: i32) attributes {dimension_semantics = [#tpu.dimension_semantics<core_parallel>], iteration_bounds = array<i64: 2>, tpu.core_type = #tpu.core_type<sc_scalar_subcore>, window_params = []} {
    return
  }
}

module attributes {stable_mosaic.version = 11 : i64} {
  func.func private @main(%arg0: i32) attributes {dimension_semantics = [#tpu.dimension_semantics<core_parallel>], iteration_bounds = array<i64: 2>, tpu.core_type = #tpu.core_type<sc_scalar_subcore>, window_params = []} {
    return
  }
}

module attributes {stable_mosaic.version = 11 : i64} {
  func.func @_bank_contrast_kernel(%arg0: i32, %arg1: memref<5xi32, #tpu.memory_space<smem>>, %arg2: memref<5xi32, #tpu.memory_space<smem>>, %arg3: memref<128x128xbf16, #tpu.memory_space<vmem>>, %arg4: memref<1x48x128xbf16, #tpu.memory_space<vmem>>, %arg5: memref<1x128xf32, #tpu.memory_space<vmem>>) attributes {dimension_semantics = [#tpu.dimension_semantics<parallel>], iteration_bounds = array<i64: 5>, scalar_prefetch = 2 : i64, scratch_operands = 0 : i64, tpu.core_type = #tpu.core_type<tc>, window_params = [{transform_indices = @transform_0, window_bounds = array<i64: 128, 128>}, {transform_indices = @transform_1, window_bounds = array<i64: 1, 48, 128>}, {transform_indices = @transform_2, window_bounds = array<i64: 1, 128>}]} {
    %0 = arith.index_cast %arg0 : i32 to index
    %1 = memref.load %arg2[%0] : memref<5xi32, #tpu.memory_space<smem>>
    %c0_i32 = arith.constant 0 : i32
    %2 = arith.cmpi sgt, %1, %c0_i32 : i32
    %3 = arith.extui %2 : i1 to i32
    %c0_i32_0 = arith.constant 0 : i32
    %4 = arith.cmpi ne, %3, %c0_i32_0 : i32
    scf.if %4 {
      %8 = arith.index_cast %arg0 : i32 to index
      %9 = memref.load %arg1[%8] : memref<5xi32, #tpu.memory_space<smem>>
      %c0 = arith.constant 0 : index
      %c0_3 = arith.constant 0 : index
      %10 = vector.load %arg3[%c0, %c0_3] : memref<128x128xbf16, #tpu.memory_space<vmem>>, vector<128x128xbf16>
      %c0_4 = arith.constant 0 : index
      %c0_5 = arith.constant 0 : index
      %c0_6 = arith.constant 0 : index
      %11 = vector.load %arg4[%c0_4, %c0_5, %c0_6] : memref<1x48x128xbf16, #tpu.memory_space<vmem>>, vector<1x48x128xbf16>
      %12 = vector.shape_cast %11 : vector<1x48x128xbf16> to vector<48x128xbf16>
      %cst = arith.constant dense<0.000000e+00> : vector<48x128xf32>
      %13 = tpu.matmul %12, %10, %cst {dimension_numbers = #tpu.dot_dimension_numbers<[1], [0], [0], [1], [0, 0, 1, 1], [], []>} : vector<48x128xbf16>, vector<128x128xbf16>, vector<48x128xf32> -> vector<48x128xf32>
      %14 = vector.extract_strided_slice %13 {offsets = [0, 0], sizes = [16, 128], strides = [1, 1]} : vector<48x128xf32> to vector<16x128xf32>
      %15 = vector.extract_strided_slice %13 {offsets = [16, 0], sizes = [32, 128], strides = [1, 1]} : vector<48x128xf32> to vector<32x128xf32>
      %16 = tpu.iota {dimensions = array<i32: 0>} : vector<16x128xi32>
      %17 = vector.broadcast %9 : i32 to vector<16x128xi32>
      %18 = arith.cmpi ne, %16, %17 : vector<16x128xi32>
      %c4_i32 = arith.constant 4 : i32
      %19 = vector.broadcast %c4_i32 : i32 to vector<16x128xi32>
      %20 = arith.cmpi slt, %16, %19 : vector<16x128xi32>
      %21 = arith.andi %18, %20 : vector<16x128xi1>
      %22 = math.exp %14 : vector<16x128xf32>
      %cst_7 = arith.constant 0.000000e+00 : f32
      %23 = vector.broadcast %cst_7 : f32 to vector<16x128xf32>
      %24 = arith.select %21, %22, %23 : vector<16x128xi1>, vector<16x128xf32>
      %cst_8 = arith.constant dense<0.000000e+00> : vector<128xf32>
      %25 = vector.multi_reduction <add>, %24, %cst_8 [0] : vector<16x128xf32> to vector<128xf32>
      %26 = vector.shape_cast %25 : vector<128xf32> to vector<1x128xf32>
      %27 = math.log %26 : vector<1x128xf32>
      %28 = vector.broadcast %27 : vector<1x128xf32> to vector<32x128xf32>
      %29 = arith.subf %28, %15 : vector<32x128xf32>
      %cst_9 = arith.constant 0.000000e+00 : f32
      %30 = vector.broadcast %cst_9 : f32 to vector<32x128xf32>
      %31 = arith.maximumf %29, %30 : vector<32x128xf32>
      %32 = math.absf %29 : vector<32x128xf32>
      %cst_10 = arith.constant 0.000000e+00 : f32
      %33 = vector.broadcast %cst_10 : f32 to vector<32x128xf32>
      %34 = arith.subf %33, %32 : vector<32x128xf32>
      %35 = math.exp %34 : vector<32x128xf32>
      %cst_11 = arith.constant 1.000000e+00 : f32
      %36 = vector.broadcast %cst_11 : f32 to vector<32x128xf32>
      %37 = arith.addf %36, %35 : vector<32x128xf32>
      %38 = math.log %37 : vector<32x128xf32>
      %39 = arith.addf %31, %38 : vector<32x128xf32>
      %40 = tpu.iota {dimensions = array<i32: 0>} : vector<32x128xi32>
      %c32_i32 = arith.constant 32 : i32
      %41 = vector.broadcast %c32_i32 : i32 to vector<32x128xi32>
      %42 = arith.cmpi slt, %40, %41 : vector<32x128xi32>
      %43 = arith.extui %42 : vector<32x128xi1> to vector<32x128xi32>
      %44 = arith.sitofp %43 : vector<32x128xi32> to vector<32x128xf32>
      %45 = arith.mulf %39, %44 : vector<32x128xf32>
      %cst_12 = arith.constant dense<0.000000e+00> : vector<128xf32>
      %46 = vector.multi_reduction <add>, %45, %cst_12 [0] : vector<32x128xf32> to vector<128xf32>
      %47 = vector.shape_cast %46 : vector<128xf32> to vector<1x128xf32>
      %cst_13 = arith.constant 3.125000e-02 : f32
      %48 = vector.broadcast %cst_13 : f32 to vector<1x128xf32>
      %49 = arith.mulf %47, %48 : vector<1x128xf32>
      %c0_14 = arith.constant 0 : index
      %c0_15 = arith.constant 0 : index
      %50 = vector.load %arg5[%c0_14, %c0_15] : memref<1x128xf32, #tpu.memory_space<vmem>>, vector<1x128xf32>
      tpu.vector_store %arg5[%c0_14, %c0_15], %49 {strides = array<i32>} : memref<1x128xf32, #tpu.memory_space<vmem>>, vector<1x128xf32>,
    } else {
    }
    %c0_i32_1 = arith.constant 0 : i32
    %5 = arith.cmpi eq, %1, %c0_i32_1 : i32
    %6 = arith.extui %5 : i1 to i32
    %c0_i32_2 = arith.constant 0 : i32
    %7 = arith.cmpi ne, %6, %c0_i32_2 : i32
    scf.if %7 {
      %cst = arith.constant 0.000000e+00 : f32
      %8 = vector.broadcast %cst : f32 to vector<1x128xf32>
      %c0 = arith.constant 0 : index
      %c0_3 = arith.constant 0 : index
      %9 = vector.load %arg5[%c0, %c0_3] : memref<1x128xf32, #tpu.memory_space<vmem>>, vector<1x128xf32>
      tpu.vector_store %arg5[%c0, %c0_3], %8 {strides = array<i32>} : memref<1x128xf32, #tpu.memory_space<vmem>>, vector<1x128xf32>,
    } else {
    }
    return
  }
  func.func @transform_0(%arg0: i32, %arg1: memref<5xi32, #tpu.memory_space<smem>>, %arg2: memref<5xi32, #tpu.memory_space<smem>>) -> (i32, i32) {
    %c0_i32 = arith.constant 0 : i32
    %c0_i32_0 = arith.constant 0 : i32
    return %c0_i32, %arg0 : i32, i32
  }
  func.func @transform_1(%arg0: i32, %arg1: memref<5xi32, #tpu.memory_space<smem>>, %arg2: memref<5xi32, #tpu.memory_space<smem>>) -> (i32, i32, i32) {
    %0 = arith.index_cast %arg0 : i32 to index
    %1 = memref.load %arg1[%0] : memref<5xi32, #tpu.memory_space<smem>>
    %c0_i32 = arith.constant 0 : i32
    %c0_i32_0 = arith.constant 0 : i32
    %c0_i32_1 = arith.constant 0 : i32
    return %1, %c0_i32, %c0_i32_0 : i32, i32, i32
  }
  func.func @transform_2(%arg0: i32, %arg1: memref<5xi32, #tpu.memory_space<smem>>, %arg2: memref<5xi32, #tpu.memory_space<smem>>) -> (i32, i32) {
    %c0_i32 = arith.constant 0 : i32
    %c0_i32_0 = arith.constant 0 : i32
    return %c0_i32, %arg0 : i32, i32
  }
}

</mosaic_0001>

<llo_original>
// kernel: custom-call
$region0: #{custom-call}
  %s0 = inlined_call_operand.vmem [shape: u32[5], index: 0, kind: output, shape index: {}]

// kernel: _contrastive_forward_core.1
$region0: #{_contrastive_forward_core.1}
  #allocation0 [shape = 'u32[]', space=smem, size = 0x4, offset = 0x4, fixed_abs, tag = 'smem constant byte address 0x4 - core index']
  #allocation1 [shape = 'u32[144,128]{1,0:T(1,128)}', space=vmem, size = 0x12000, scoped, tag = 'internal scratch']
  #allocation2 [shape = 's32[1]{0}', space=sflag, size = 0x4, scoped, tag = 'scoped memory for _contrastive_forward_core.1']
  #allocation3 [shape = 'u8[512]{0}', space=smem, size = 0x200, scoped, tag = 'prefetched SMEM operand 0']
  #allocation4 [shape = 'u8[512]{0}', space=smem, size = 0x200, scoped, tag = 'prefetched SMEM operand 1']
  %s0 = inlined_call_operand.vmem [shape: s32[5], index: 0, kind: input, shape index: {}]
  %s1 = inlined_call_operand.vmem [shape: s32[5], index: 1, kind: input, shape index: {}]
  %s2 = inlined_call_operand.vmem [shape: bf16[128,640], index: 2, kind: input, shape index: {}]
  %s3 = inlined_call_operand.vmem [shape: bf16[4,48,128], index: 3, kind: input, shape index: {}]
  %s4 = inlined_call_operand.vmem [shape: f32[1,640], index: 4, kind: output, shape index: {}]
  %s5 = sld [smem:[#allocation0]]
  $region90: #{_contrastive_forward_core.1} parent=0
    _
  %s7 = ssub.s32 1, %s5
  %s8 = scalar_select 0, %s7, %s5
  %s9 = sshll.u32 %s0, 4
  %s10 = int_to_ptr.vmem [resolvable:$true] %s9
  %12 = dma.vmem_to_smem %s10, 16, [#allocation3], [#allocation2]
  %s13 = sshll.u32 %s1, 4
  %s14 = int_to_ptr.vmem [resolvable:$true] %s13
  %16 = dma.vmem_to_smem %s14, 16, [#allocation4], [#allocation2]
  %17 = dma.done [#allocation2], 32
  %18 = sfence
  $region1: #{_contrastive_forward_core.1} parent=0
    #allocation5 [shape = 'u8[65536]{0}', space=vmem, size = 0x10000, scoped, tag = 'input window, operand 2']
    loop: start=0, step=1, limit=7
    $region2: #{_contrastive_forward_core.1} parent=1 // loop_pre_header
      _
    $region3: #{_contrastive_forward_core.1} parent=1 // loop_header
      %s20 = sphi 0, %s24
      %p21 = scmp.ge.s32.totalorder %s20, 7
      %s30 = sphi 0, %s32
      %s33 = sphi 0, %s30
      %s34 = sphi 0, %s33
      %s50 = sphi 0, %s34
      %s58 = sphi 0, %s60
      %s61 = sphi 0, %s58
      %s62 = sphi 0, %s61
      %s78 = sphi 0, %s62
      %s84 = sphi 0, %s86
      %s87 = sphi 0, %s84
      %s88 = sphi 0, %s87
      %s104 = sphi 0, %s88
    $region4: #{_contrastive_forward_core.1} parent=1 // loop_header_branch
      %23 = sbr.rel (%p21) target = $region8
    $region5: #{_contrastive_forward_core.1} parent=1 // loop_body
      %s25 = ssub.s32 %s20, 1
      %s26 = ssub.s32 %s20, 2
      %s27 = sadd.s32 %s20, 1
      %s28 = ssub.s32 %s20, %s27
      %p29 = scmp.eq.s32.totalorder %s28, 0
      %s31 = sadd.s32 %s30, 1
      %s32 = scalar_select %p29, %s30, %s31
      %p35 = pneg %p29
      %p36 = scmp.eq.s32.totalorder %s20, 4
      %p37 = por %p35, %p36
      %p38 = scmp.ne.s32.totalorder %s30, %s33
      %p39 = scmp.eq.s32.totalorder %s20, 0
      %p40 = por %p38, %p39
      %p41 = scmp.ne.s32.totalorder %s30, %s33
      %p42 = scmp.eq.s32.totalorder %s25, 4
      %p43 = por %p41, %p42
      %p44 = scmp.ne.s32.totalorder %s33, %s34
      %p45 = scmp.eq.s32.totalorder %s25, 0
      %p46 = por %p44, %p45
      %p47 = scmp.ne.s32.totalorder %s33, %s34
      %p48 = scmp.eq.s32.totalorder %s26, 4
      %p49 = por %p47, %p48
      %p51 = scmp.ne.s32.totalorder %s34, %s50
      %p52 = scmp.eq.s32.totalorder %s26, 0
      %p53 = por %p51, %p52
      %s54 = sld [smem:[#allocation3 + %s20]]
      %s55 = sld [smem:[#allocation3 + %s27]]
      %s56 = ssub.s32 %s54, %s55
      %p57 = scmp.eq.s32.totalorder %s56, 0
      %s59 = sadd.s32 %s58, 1
      %s60 = scalar_select %p57, %s58, %s59
      %p63 = pneg %p57
      %p64 = scmp.eq.s32.totalorder %s20, 4
      %p65 = por %p63, %p64
      %p66 = scmp.ne.s32.totalorder %s58, %s61
      %p67 = scmp.eq.s32.totalorder %s20, 0
      %p68 = por %p66, %p67
      %p69 = scmp.ne.s32.totalorder %s58, %s61
      %p70 = scmp.eq.s32.totalorder %s25, 4
      %p71 = por %p69, %p70
      %p72 = scmp.ne.s32.totalorder %s61, %s62
      %p73 = scmp.eq.s32.totalorder %s25, 0
      %p74 = por %p72, %p73
      %p75 = scmp.ne.s32.totalorder %s61, %s62
      %p76 = scmp.eq.s32.totalorder %s26, 4
      %p77 = por %p75, %p76
      %p79 = scmp.ne.s32.totalorder %s62, %s78
      %p80 = scmp.eq.s32.totalorder %s26, 0
      %p81 = por %p79, %p80
      %s82 = ssub.s32 %s20, %s27
      %p83 = scmp.eq.s32.totalorder %s82, 0
      %s85 = sadd.s32 %s84, 1
      %s86 = scalar_select %p83, %s84, %s85
      %p89 = pneg %p83
      %p90 = scmp.eq.s32.totalorder %s20, 4
      %p91 = por %p89, %p90
      %p92 = scmp.ne.s32.totalorder %s84, %s87
      %p93 = scmp.eq.s32.totalorder %s20, 0
      %p94 = por %p92, %p93
      %p95 = scmp.ne.s32.totalorder %s84, %s87
      %p96 = scmp.eq.s32.totalorder %s25, 4
      %p97 = por %p95, %p96
      %p98 = scmp.ne.s32.totalorder %s87, %s88
      %p99 = scmp.eq.s32.totalorder %s25, 0
      %p100 = por %p98, %p99
      %p101 = scmp.ne.s32.totalorder %s87, %s88
      %p102 = scmp.eq.s32.totalorder %s26, 4
      %p103 = por %p101, %p102
      %p105 = scmp.ne.s32.totalorder %s88, %s104
      %p106 = scmp.eq.s32.totalorder %s26, 0
      %p107 = por %p105, %p106
      %p108 = scmp.le.s32.totalorder 1, %s20
      %p109 = scmp.lt.s32.totalorder %s20, 6
      %p110 = pnand %p108, %p109
      %p111 = pneg %p110
      // Predicated region
      $region9: #{_contrastive_forward_core.1} parent=5 // pred_check
        _
      $region10: #{_contrastive_forward_core.1} parent=5 // pred_check_branch
        %113 = sbr.rel (%p110) target = $region12
      $region11: #{_contrastive_forward_core.1} parent=5 // pred_region
        %s114 = ssub.s32 %s20, 1
      $region12: #{_contrastive_forward_core.1} parent=5 // pred_fallthru
        _
      %p115 = scmp.lt.s32.totalorder %s20, 5
      // Predicated region
      $region13: #{_contrastive_forward_core.1} parent=5 // pred_check
        %p116 = pneg %p115
      $region14: #{_contrastive_forward_core.1} parent=5 // pred_check_branch
        %118 = sbr.rel (%p116) target = $region16
      $region15: #{_contrastive_forward_core.1} parent=5 // pred_region
        // Predicated region
        $region17: #{_contrastive_forward_core.1} parent=15 // pred_check
          %p119 = pneg %p40
        $region18: #{_contrastive_forward_core.1} parent=15 // pred_check_branch
          %121 = sbr.rel (%p119) target = $region20
        $region19: #{_contrastive_forward_core.1} parent=15 // pred_region
          %s122 = sand.u32 %s30, 1
          %s123 = sand.u32 %s30, 1
          %s124 = smul.addr %s123, 64
          %s125 = scalar_lea.vmem [#allocation5], %s124
          %s126 = smul.addr %s20, 4
          %s127 = scalar_lea.vmem %s2, %s126
          // Predicated region
          $region21: #{_contrastive_forward_core.1} parent=19 // pred_check
            _
          $region22: #{_contrastive_forward_core.1} parent=19 // pred_check_branch
            %129 = sbr.rel (0) target = $region24
          $region23: #{_contrastive_forward_core.1} parent=19 // pred_region
            // Predicated region
            $region25: #{_contrastive_forward_core.1} parent=23 // pred_check
              _
            $region26: #{_contrastive_forward_core.1} parent=23 // pred_check_branch
              %131 = sbr.rel target = $region28
            $region27: #{_contrastive_forward_core.1} parent=23 // pred_region
              // Predicated region
              $region40: #{_contrastive_forward_core.1} parent=27 // pred_check
                _
              $region41: #{_contrastive_forward_core.1} parent=27 // pred_check_branch
                %176 = sbr.rel (0) target = $region43
              $region42: #{_contrastive_forward_core.1} parent=27 // pred_region
                loop: start=0, step=1, limit=1
                $region44: #{_contrastive_forward_core.1} parent=42 // loop_pre_header
                  _
                $region45: #{_contrastive_forward_core.1} parent=42 // loop_header
                  %s178 = sphi 0, %s182
                  %p179 = scmp.ge.s32.totalorder %s178, 1
                  %s183 = sphi %s127, %s127
                  %s184 = sphi %s125, %s125
                $region46: #{_contrastive_forward_core.1} parent=42 // loop_header_branch
                  %181 = sbr.rel (%p179) target = $region50
                $region47: #{_contrastive_forward_core.1} parent=42 // loop_body
                  _
                $region48: #{_contrastive_forward_core.1} parent=42 // loop_footer
                  %s182 = sadd.s32 1, %s178
                $region49: #{_contrastive_forward_core.1} parent=42 // loop_footer_branch
                  %177 = sbr.rel target = $region45
                $region50: #{_contrastive_forward_core.1} parent=42 // loop_exit
                  _
                loop: start=0, step=1, limit=1
                $region51: #{_contrastive_forward_core.1} parent=42 // loop_pre_header
                  _
                $region52: #{_contrastive_forward_core.1} parent=42 // loop_header
                  %s187 = sphi 0, %s191
                  %p188 = scmp.ge.s32.totalorder %s187, 1
                  %s192 = sphi %s127, %s127
                  %s193 = sphi %s125, %s125
                $region53: #{_contrastive_forward_core.1} parent=42 // loop_header_branch
                  %190 = sbr.rel (%p188) target = $region57
                $region54: #{_contrastive_forward_core.1} parent=42 // loop_body
                  %v194 = vld [vmem:[%s192] sm:$0xf]
                  %195 = vst [vmem:[%s193] sm:$0xf] %v194
                  %v196 = vld [vmem:[%s192 + $0x14] sm:$0xf]
                  %197 = vst [vmem:[%s193 + $0x4] sm:$0xf] %v196
                  %v198 = vld [vmem:[%s192 + $0x28] sm:$0xf]
                  %199 = vst [vmem:[%s193 + $0x8] sm:$0xf] %v198
                  %v200 = vld [vmem:[%s192 + $0x3c] sm:$0xf]
                  %201 = vst [vmem:[%s193 + $0xc] sm:$0xf] %v200
                  %v202 = vld [vmem:[%s192 + $0x50] sm:$0xf]
                  %203 = vst [vmem:[%s193 + $0x10] sm:$0xf] %v202
                  %v204 = vld [vmem:[%s192 + $0x64] sm:$0xf]
                  %205 = vst [vmem:[%s193 + $0x14] sm:$0xf] %v204
                  %v206 = vld [vmem:[%s192 + $0x78] sm:$0xf]
                  %207 = vst [vmem:[%s193 + $0x18] sm:$0xf] %v206
                  %v208 = vld [vmem:[%s192 + $0x8c] sm:$0xf]
                  %209 = vst [vmem:[%s193 + $0x1c] sm:$0xf] %v208
                  %v210 = vld [vmem:[%s192 + $0xa0] sm:$0xf]
                  %211 = vst [vmem:[%s193 + $0x20] sm:$0xf] %v210
                  %v212 = vld [vmem:[%s192 + $0xb4] sm:$0xf]
                  %213 = vst [vmem:[%s193 + $0x24] sm:$0xf] %v212
                  %v214 = vld [vmem:[%s192 + $0xc8] sm:$0xf]
                  %215 = vst [vmem:[%s193 + $0x28] sm:$0xf] %v214
                  %v216 = vld [vmem:[%s192 + $0xdc] sm:$0xf]
                  %217 = vst [vmem:[%s193 + $0x2c] sm:$0xf] %v216
                  %v218 = vld [vmem:[%s192 + $0xf0] sm:$0xf]
                  %219 = vst [vmem:[%s193 + $0x30] sm:$0xf] %v218
                  %v220 = vld [vmem:[%s192 + $0x104] sm:$0xf]
                  %221 = vst [vmem:[%s193 + $0x34] sm:$0xf] %v220
                  %v222 = vld [vmem:[%s192 + $0x118] sm:$0xf]
                  %223 = vst [vmem:[%s193 + $0x38] sm:$0xf] %v222
                  %v224 = vld [vmem:[%s192 + $0x12c] sm:$0xf]
                  %225 = vst [vmem:[%s193 + $0x3c] sm:$0xf] %v224
                $region55: #{_contrastive_forward_core.1} parent=42 // loop_footer
                  %s191 = sadd.s32 1, %s187
                $region56: #{_contrastive_forward_core.1} parent=42 // loop_footer_branch
                  %186 = sbr.rel target = $region52
                $region57: #{_contrastive_forward_core.1} parent=42 // loop_exit
                  _
              $region43: #{_contrastive_forward_core.1} parent=27 // pred_fallthru
                _
            $region28: #{_contrastive_forward_core.1} parent=23 // pred_fallthru
              _
            // Predicated region
            $region29: #{_contrastive_forward_core.1} parent=23 // pred_check
              _
            $region30: #{_contrastive_forward_core.1} parent=23 // pred_check_branch
              %133 = sbr.rel (0) target = $region32
            $region31: #{_contrastive_forward_core.1} parent=23 // pred_region
              loop: start=0, step=1, limit=1
              $region33: #{_contrastive_forward_core.1} parent=31 // loop_pre_header
                _
              $region34: #{_contrastive_forward_core.1} parent=31 // loop_header
                %s136 = sphi 0, %s140
                %p137 = scmp.ge.s32.totalorder %s136, 1
                %s141 = sphi %s127, %s127
                %s142 = sphi %s125, %s125
              $region35: #{_contrastive_forward_core.1} parent=31 // loop_header_branch
                %139 = sbr.rel (%p137) target = $region39
              $region36: #{_contrastive_forward_core.1} parent=31 // loop_body
                %v143 = vld [vmem:[%s141] sm:$0xf]
                %144 = vst [vmem:[%s142] sm:$0xf] %v143
                %v145 = vld [vmem:[%s141 + $0x14] sm:$0xf]
                %146 = vst [vmem:[%s142 + $0x4] sm:$0xf] %v145
                %v147 = vld [vmem:[%s141 + $0x28] sm:$0xf]
                %148 = vst [vmem:[%s142 + $0x8] sm:$0xf] %v147
                %v149 = vld [vmem:[%s141 + $0x3c] sm:$0xf]
                %150 = vst [vmem:[%s142 + $0xc] sm:$0xf] %v149
                %v151 = vld [vmem:[%s141 + $0x50] sm:$0xf]
                %152 = vst [vmem:[%s142 + $0x10] sm:$0xf] %v151
                %v153 = vld [vmem:[%s141 + $0x64] sm:$0xf]
                %154 = vst [vmem:[%s142 + $0x14] sm:$0xf] %v153
                %v155 = vld [vmem:[%s141 + $0x78] sm:$0xf]
                %156 = vst [vmem:[%s142 + $0x18] sm:$0xf] %v155
                %v157 = vld [vmem:[%s141 + $0x8c] sm:$0xf]
                %158 = vst [vmem:[%s142 + $0x1c] sm:$0xf] %v157
                %v159 = vld [vmem:[%s141 + $0xa0] sm:$0xf]
                %160 = vst [vmem:[%s142 + $0x20] sm:$0xf] %v159
                %v161 = vld [vmem:[%s141 + $0xb4] sm:$0xf]
                %162 = vst [vmem:[%s142 + $0x24] sm:$0xf] %v161
                %v163 = vld [vmem:[%s141 + $0xc8] sm:$0xf]
                %164 = vst [vmem:[%s142 + $0x28] sm:$0xf] %v163
                %v165 = vld [vmem:[%s141 + $0xdc] sm:$0xf]
                %166 = vst [vmem:[%s142 + $0x2c] sm:$0xf] %v165
                %v167 = vld [vmem:[%s141 + $0xf0] sm:$0xf]
                %168 = vst [vmem:[%s142 + $0x30] sm:$0xf] %v167
                %v169 = vld [vmem:[%s141 + $0x104] sm:$0xf]
                %170 = vst [vmem:[%s142 + $0x34] sm:$0xf] %v169
                %v171 = vld [vmem:[%s141 + $0x118] sm:$0xf]
                %172 = vst [vmem:[%s142 + $0x38] sm:$0xf] %v171
                %v173 = vld [vmem:[%s141 + $0x12c] sm:$0xf]
                %174 = vst [vmem:[%s142 + $0x3c] sm:$0xf] %v173
              $region37: #{_contrastive_forward_core.1} parent=31 // loop_footer
                %s140 = sadd.s32 1, %s136
              $region38: #{_contrastive_forward_core.1} parent=31 // loop_footer_branch
                %135 = sbr.rel target = $region34
              $region39: #{_contrastive_forward_core.1} parent=31 // loop_exit
                _
            $region32: #{_contrastive_forward_core.1} parent=23 // pred_fallthru
              _
          $region24: #{_contrastive_forward_core.1} parent=19 // pred_fallthru
            _
          %226 = vnop
        $region20: #{_contrastive_forward_core.1} parent=15 // pred_fallthru
          _
        // Predicated region
        $region58: #{_contrastive_forward_core.1} parent=15 // pred_check
          %p227 = pneg %p68
        $region59: #{_contrastive_forward_core.1} parent=15 // pred_check_branch
          %229 = sbr.rel (%p227) target = $region61
        $region60: #{_contrastive_forward_core.1} parent=15 // pred_region
          %s230 = sld [smem:[#allocation3 + %s20]]
          %p231 = scmp.lt.s32.totalorder %s230, 3
          %s232 = scalar_select %p231, %s230, 3
          %s233 = smul.addr %s232, 6
          %s234 = smul.addr %s233, 4
          %s235 = scalar_lea.vmem %s3, %s234
          %s236 = sld [smem:[#allocation3 + %s20]]
        $region61: #{_contrastive_forward_core.1} parent=15 // pred_fallthru
          _
      $region16: #{_contrastive_forward_core.1} parent=5 // pred_fallthru
        _
      %p237 = scmp.le.s32.totalorder 1, %s20
      %p238 = scmp.lt.s32.totalorder %s20, 6
      %p239 = pnand %p237, %p238
      %p240 = pneg %p239
      // Predicated region
      $region62: #{_contrastive_forward_core.1} parent=5 // pred_check
        _
      $region63: #{_contrastive_forward_core.1} parent=5 // pred_check_branch
        %242 = sbr.rel (%p239) target = $region65
      $region64: #{_contrastive_forward_core.1} parent=5 // pred_region
        %s243 = ssub.s32 %s20, 1
        %s244 = sand.u32 %s33, 1
        %s245 = sand.u32 %s33, 1
        %s246 = smul.addr %s245, 64
        %s247 = scalar_lea.vmem [#allocation5], %s246
        // Predicated region
        $region66: #{_contrastive_forward_core.1} parent=64 // pred_check
          %p248 = pneg %p46
        $region67: #{_contrastive_forward_core.1} parent=64 // pred_check_branch
          %250 = sbr.rel (%p248) target = $region69
        $region68: #{_contrastive_forward_core.1} parent=64 // pred_region
          _
        $region69: #{_contrastive_forward_core.1} parent=64 // pred_fallthru
          _
        %s251 = sand.u32 %s33, 1
        %s252 = sand.u32 %s33, 1
        %s253 = smul.addr %s252, 64
        %s254 = scalar_lea.vmem [#allocation5], %s253
        %p255 = pneg %p46
        %p256 = pneg %p43
        %s257 = sld [smem:[#allocation3 + %s25]]
        %p258 = scmp.lt.s32.totalorder %s257, 3
        %s259 = scalar_select %p258, %s257, 3
        %s260 = smul.addr %s259, 6
        %s261 = smul.addr %s260, 4
        %s262 = scalar_lea.vmem %s3, %s261
        %p263 = pneg %p74
        %p264 = pneg %p71
        %p265 = pneg %p100
        %p266 = pneg %p97
        %p267 = scmp.lt.s32.totalorder %s25, 4
        %s268 = scalar_select %p267, %s25, 4
        %s269 = scalar_lea.vmem %s4, %s268
        %s270 = sld [smem:[#allocation3 + %s25]]
        %p271 = scmp.lt.s32.totalorder %s270, 3
        %s272 = scalar_select %p271, %s270, 3
        %s273 = smul.addr %s272, 6
        %s274 = smul.addr %s273, 4
        %s275 = scalar_lea.vmem %s3, %s274
        %s276 = sld [smem:[#allocation3 + %s25]]
        %p277 = scmp.lt.s32.totalorder %s25, 4
        %s278 = scalar_select %p277, %s25, 4
        %s279 = scalar_lea.vmem %s4, %s278
        %s281 = sld [smem:[#allocation4 + %s25]]
        %p282 = scmp.gt.s32.totalorder %s281, 0
        // Predicated region
        $region70: #{_contrastive_forward_core.1} parent=64 // pred_check
          %p283 = pneg %p282
        $region71: #{_contrastive_forward_core.1} parent=64 // pred_check_branch
          %285 = sbr.rel (%p283) target = $region73
        $region72: #{_contrastive_forward_core.1} parent=64 // pred_region
          %s286 = sld [smem:[#allocation3 + %s25]]
          %v287 = vld [vmem:[%s247] sm:$0xf]
          %v288 = vld [vmem:[%s247 + $0x4] sm:$0xf]
          %v289 = vld [vmem:[%s247 + $0x8] sm:$0xf]
          %v290 = vld [vmem:[%s247 + $0xc] sm:$0xf]
          %v291 = vld [vmem:[%s247 + $0x10] sm:$0xf]
          %v292 = vld [vmem:[%s247 + $0x14] sm:$0xf]
          %v293 = vld [vmem:[%s247 + $0x18] sm:$0xf]
          %v294 = vld [vmem:[%s247 + $0x1c] sm:$0xf]
          %v295 = vld [vmem:[%s247 + $0x20] sm:$0xf]
          %v296 = vld [vmem:[%s247 + $0x24] sm:$0xf]
          %v297 = vld [vmem:[%s247 + $0x28] sm:$0xf]
          %v298 = vld [vmem:[%s247 + $0x2c] sm:$0xf]
          %v299 = vld [vmem:[%s247 + $0x30] sm:$0xf]
          %v300 = vld [vmem:[%s247 + $0x34] sm:$0xf]
          %v301 = vld [vmem:[%s247 + $0x38] sm:$0xf]
          %v302 = vld [vmem:[%s247 + $0x3c] sm:$0xf]
          %v303 = vld [vmem:[%s275] sm:$0xf]
          %v304 = vld [vmem:[%s275 + $0x4] sm:$0xf]
          %v305 = vld [vmem:[%s275 + $0x8] sm:$0xf]
          %v306 = vld [vmem:[%s275 + $0xc] sm:$0xf]
          %v307 = vld [vmem:[%s275 + $0x10] sm:$0xf]
          %v308 = vld [vmem:[%s275 + $0x14] sm:$0xf]
          %v315 = vunpack.c.l.b16 %v303
          %v316 = vunpack.c.l.b16 %v304
          %v317 = vunpack.c.l.b16 %v305
          %v318 = vunpack.c.l.b16 %v306
          %v319 = vunpack.c.l.b16 %v307
          %v320 = vunpack.c.l.b16 %v308
          %v321 = vpack.c.b16 %v316, %v315
          %v322 = vpack.c.b16 %v318, %v317
          %v323 = vpack.c.b16 %v320, %v319
          %v343 = vunpack.c.l.b16 %v287
          %v344 = vunpack.c.l.b16 %v288
          %v345 = vunpack.c.l.b16 %v289
          %v346 = vunpack.c.l.b16 %v290
          %v347 = vunpack.c.l.b16 %v291
          %v348 = vunpack.c.l.b16 %v292
          %v349 = vunpack.c.l.b16 %v293
          %v350 = vunpack.c.l.b16 %v294
          %v351 = vunpack.c.l.b16 %v295
          %v352 = vunpack.c.l.b16 %v296
          %v353 = vunpack.c.l.b16 %v297
          %v354 = vunpack.c.l.b16 %v298
          %v355 = vunpack.c.l.b16 %v299
          %v356 = vunpack.c.l.b16 %v300
          %v357 = vunpack.c.l.b16 %v301
          %v358 = vunpack.c.l.b16 %v302
          %v359 = vpack.c.b16 %v344, %v343
          %v360 = vpack.c.b16 %v346, %v345
          %v361 = vpack.c.b16 %v348, %v347
          %v362 = vpack.c.b16 %v350, %v349
          %v363 = vpack.c.b16 %v352, %v351
          %v364 = vpack.c.b16 %v354, %v353
          %v365 = vpack.c.b16 %v356, %v355
          %v366 = vpack.c.b16 %v358, %v357
          %375 = vmatprep.subr.bf16.mxu0 0
          %376 = vmatpush1.bf16.msra.mxu0 %v359
          %377 = vmatprep.subr.bf16.mxu0 0
          %378 = vmatpush1.bf16.msra.mxu0 %v360
          %379 = vmatprep.subr.bf16.mxu0 0
          %380 = vmatpush1.bf16.msra.mxu0 %v361
          %381 = vmatprep.subr.bf16.mxu0 0
          %382 = vmatpush1.bf16.msra.mxu0 %v362
          %383 = vmatprep.subr.bf16.mxu0 0
          %384 = vmatpush1.bf16.msra.mxu0 %v363
          %385 = vmatprep.subr.bf16.mxu0 0
          %386 = vmatpush1.bf16.msra.mxu0 %v364
          %387 = vmatprep.subr.bf16.mxu0 0
          %388 = vmatpush1.bf16.msra.mxu0 %v365
          %389 = vmatprep.subr.bf16.mxu0 0
          %390 = vmatpush1.bf16.msra.mxu0 %v366
          %391 = vmatprep.subr.bf16.mxu0 0
          %392 = vmatpush1.bf16.msra.mxu0 0
          %393 = vmatprep.subr.bf16.mxu0 0
          %394 = vmatpush1.bf16.msra.mxu0 0
          %395 = vmatprep.subr.bf16.mxu0 0
          %396 = vmatpush1.bf16.msra.mxu0 0
          %397 = vmatprep.subr.bf16.mxu0 0
          %398 = vmatpush1.bf16.msra.mxu0 0
          %399 = vmatprep.subr.bf16.mxu0 0
          %400 = vmatpush1.bf16.msra.mxu0 0
          %401 = vmatprep.subr.bf16.mxu0 0
          %402 = vmatpush1.bf16.msra.mxu0 0
          %403 = vmatprep.subr.bf16.mxu0 0
          %404 = vmatpush1.bf16.msra.mxu0 0
          %405 = vmatprep.subr.bf16.mxu0 0
          %406 = vmatpush1.bf16.msra.mxu0 0
          %407 = vmatprep.mubr.bf16.mxu0 0
          %408 = vmatmul.mubr.bf16.gmra.mrb[0].mxu0 %v321
          %v409 = vpop.f32.mrb[0].mxu0
          %v410 = vadd.f32 0.0, %v409
          %v411 = vpop.f32.mrb[0].mxu0
          %v412 = vpop.f32.mrb[0].mxu0
          %v413 = vadd.f32 0.0, %v412
          %v414 = vpop.f32.mrb[0].mxu0
          %415 = vmatprep.mubr.bf16.mxu0 0
          %416 = vmatmul.mubr.bf16.gmra.mrb[0].mxu0 %v322
          %v417 = vpop.f32.mrb[0].mxu0
          %v418 = vadd.f32 0.0, %v417
          %v419 = vpop.f32.mrb[0].mxu0
          %v420 = vpop.f32.mrb[0].mxu0
          %v421 = vadd.f32 0.0, %v420
          %v422 = vpop.f32.mrb[0].mxu0
          %423 = vmatprep.mubr.bf16.mxu0 0
          %424 = vmatmul.mubr.bf16.gmra.mrb[0].mxu0 %v323
          %v425 = vpop.f32.mrb[0].mxu0
          %v426 = vadd.f32 0.0, %v425
          %v427 = vpop.f32.mrb[0].mxu0
          %v428 = vpop.f32.mrb[0].mxu0
          %v429 = vadd.f32 0.0, %v428
          %v430 = vpop.f32.mrb[0].mxu0
          %431 = vdwg.mxu0
          %v432 = vlaneseq
          %v433 = vshrl.u32 %v432, 7
          %v434 = vadd.s32 %v433, 8
          %v435 = vstv %s286
          %vm436 = vcmp.ne.s32.totalorder %v433, %v435
          %vm437 = vcmp.ne.s32.totalorder %v434, %v435
          %vm438 = vcmp.lt.s32.totalorder %v433, 4
          %vm439 = vcmp.lt.s32.totalorder %v434, 4
          %vm440 = vmand %vm436, %vm438
          %vm441 = vmand %vm437, %vm439
          %v442 = vmul.f32 %v410, 1.442695
          %v443 = vpow.pop %v442
          %v444 = vmul.f32 %v413, 1.442695
          %v445 = vpow.pop %v444
          %v446 = vsel %vm440, %v443, 0.0
          %v447 = vsel %vm441, %v445, 0.0
          %v448 = vadd.f32 %v446, %v447
          %v449 = vrot.slane %v448, 4
          %v450 = vadd.f32 %v448, %v449
          %v451 = vrot.slane %v450, 2
          %v452 = vadd.f32 %v450, %v451
          %v453 = vrot.slane %v452, 1
          %v454 = vadd.f32 %v452, %v453
          %v455 = vlog2.pop %v454
          %v456 = vmul.f32 %v455, 0.6931472
          %v457 = vsub.f32 %v456, %v418
          %v458 = vsub.f32 %v456, %v421
          %v459 = vsub.f32 %v456, %v426
          %v460 = vsub.f32 %v456, %v429
          %v461 = vmax.f32 %v457, 0.0
          %v462 = vmax.f32 %v458, 0.0
          %v463 = vmax.f32 %v459, 0.0
          %v464 = vmax.f32 %v460, 0.0
          %v465 = vand.u32 2147483647, %v457
          %v466 = vand.u32 2147483647, %v458
          %v467 = vand.u32 2147483647, %v459
          %v468 = vand.u32 2147483647, %v460
          %v469 = vsub.f32 0.0, %v465
          %v470 = vsub.f32 0.0, %v466
          %v471 = vsub.f32 0.0, %v467
          %v472 = vsub.f32 0.0, %v468
          %v473 = vmul.f32 %v469, 1.442695
          %v474 = vpow.pop %v473
          %v475 = vmul.f32 %v470, 1.442695
          %v476 = vpow.pop %v475
          %v477 = vmul.f32 %v471, 1.442695
          %v478 = vpow.pop %v477
          %v479 = vmul.f32 %v472, 1.442695
          %v480 = vpow.pop %v479
          %v481 = vadd.f32 %v474, 1.0
          %v482 = vadd.f32 %v476, 1.0
          %v483 = vadd.f32 %v478, 1.0
          %v484 = vadd.f32 %v480, 1.0
          %v485 = vlog2.pop %v481
          %v486 = vmul.f32 %v485, 0.6931472
          %v487 = vlog2.pop %v482
          %v488 = vmul.f32 %v487, 0.6931472
          %v489 = vlog2.pop %v483
          %v490 = vmul.f32 %v489, 0.6931472
          %v491 = vlog2.pop %v484
          %v492 = vmul.f32 %v491, 0.6931472
          %v493 = vadd.f32 %v461, %v486
          %v494 = vadd.f32 %v462, %v488
          %v495 = vadd.f32 %v463, %v490
          %v496 = vadd.f32 %v464, %v492
          %v497 = vadd.s32 %v433, 16
          %v498 = vadd.s32 %v433, 24
          %vm499 = vcmp.lt.s32.totalorder %v433, 32
          %vm500 = vcmp.lt.s32.totalorder %v434, 32
          %vm501 = vcmp.lt.s32.totalorder %v497, 32
          %vm502 = vcmp.lt.s32.totalorder %v498, 32
          %v503 = vsel %vm499, 1, 0
          %v504 = vsel %vm500, 1, 0
          %v505 = vsel %vm501, 1, 0
          %v506 = vsel %vm502, 1, 0
          %v507 = vcvt.s32.f32 %v503
          %v508 = vcvt.s32.f32 %v504
          %v509 = vcvt.s32.f32 %v505
          %v510 = vcvt.s32.f32 %v506
          %v511 = vmul.f32 %v493, %v507
          %v512 = vmul.f32 %v494, %v508
          %v513 = vmul.f32 %v495, %v509
          %v514 = vmul.f32 %v496, %v510
          %v515 = vadd.f32 %v511, %v512
          %v516 = vadd.f32 %v515, %v513
          %v517 = vadd.f32 %v516, %v514
          %v518 = vrot.slane %v517, 4
          %v519 = vadd.f32 %v517, %v518
          %v520 = vrot.slane %v519, 2
          %v521 = vadd.f32 %v519, %v520
          %v522 = vrot.slane %v521, 1
          %v523 = vadd.f32 %v521, %v522
          %v524 = vmul.f32 %v523, 0.03125
          %525 = vst [vmem:[%s279] sm:$0x1] %v524
        $region73: #{_contrastive_forward_core.1} parent=64 // pred_fallthru
          _
        %p526 = scmp.eq.s32.totalorder %s281, 0
        // Predicated region
        $region74: #{_contrastive_forward_core.1} parent=64 // pred_check
          %p527 = pneg %p526
        $region75: #{_contrastive_forward_core.1} parent=64 // pred_check_branch
          %529 = sbr.rel (%p527) target = $region77
        $region76: #{_contrastive_forward_core.1} parent=64 // pred_region
          %530 = vst [vmem:[%s279] sm:$0x1] 0.0
        $region77: #{_contrastive_forward_core.1} parent=64 // pred_fallthru
          _
        %p531 = scmp.lt.s32.totalorder %s25, 4
        %s532 = scalar_select %p531, %s25, 4
        %s533 = scalar_lea.vmem %s4, %s532
        // Predicated region
        $region78: #{_contrastive_forward_core.1} parent=64 // pred_check
          %p534 = pneg %p97
        $region79: #{_contrastive_forward_core.1} parent=64 // pred_check_branch
          %536 = sbr.rel (%p534) target = $region81
        $region80: #{_contrastive_forward_core.1} parent=64 // pred_region
          _
        $region81: #{_contrastive_forward_core.1} parent=64 // pred_fallthru
          _
      $region65: #{_contrastive_forward_core.1} parent=5 // pred_fallthru
        _
      %p537 = scmp.le.s32.totalorder 2, %s20
      // Predicated region
      $region82: #{_contrastive_forward_core.1} parent=5 // pred_check
        %p538 = pneg %p537
      $region83: #{_contrastive_forward_core.1} parent=5 // pred_check_branch
        %540 = sbr.rel (%p538) target = $region85
      $region84: #{_contrastive_forward_core.1} parent=5 // pred_region
        %s541 = ssub.s32 %s20, 2
        // Predicated region
        $region86: #{_contrastive_forward_core.1} parent=84 // pred_check
          %p542 = pneg %p103
        $region87: #{_contrastive_forward_core.1} parent=84 // pred_check_branch
          %544 = sbr.rel (%p542) target = $region89
        $region88: #{_contrastive_forward_core.1} parent=84 // pred_region
          %p545 = scmp.lt.s32.totalorder %s26, 4
          %s546 = scalar_select %p545, %s26, 4
          %s547 = scalar_lea.vmem %s4, %s546
        $region89: #{_contrastive_forward_core.1} parent=84 // pred_fallthru
          _
      $region85: #{_contrastive_forward_core.1} parent=5 // pred_fallthru
        _
    $region6: #{_contrastive_forward_core.1} parent=1 // loop_footer
      %s24 = sadd.s32 1, %s20
    $region7: #{_contrastive_forward_core.1} parent=1 // loop_footer_branch
      %19 = sbr.rel target = $region3
    $region8: #{_contrastive_forward_core.1} parent=1 // loop_exit
      _

</llo_original>
